<compile_context>
chip_gen: v7x
topology: tpu7x:2x2x1
jax: 0.10.0
libtpu: 0.0.40
codegen_flags: <defaults>
</compile_context>

<pallas_src>
import functools

import jax
import jax.numpy as jnp
from jax.experimental import pallas as pl
from jax.experimental.pallas import tpu as pltpu

_NEG = -1e30  # plain Python float (NOT a jax array -> not captured as a constant)


def _round_up(x, m):
    return ((x + m - 1) // m) * m


def _vmem_capacity_bytes(default=64 << 20):
    """Per-core VMEM capacity; falls back to the smallest (v7x) value."""
    try:
        return int(pltpu.get_tpu_info().vmem_capacity_bytes)
    except Exception:
        return default


def _generator_kernel(x_ref, w_ref, b_ref, o_ref, m_sc, l_sc, *,
                      n_rows, vocab, tile_m, tile_n, grid_n, rem):
    """Fused logits + online log-sum-exp + in-place normalize for one (i, j) tile."""
    i = pl.program_id(0)   # row tile
    j = pl.program_id(1)   # vocab tile (reduction axis, innermost / "arbitrary")
    last_j = grid_n - 1    # static Python int

    @pl.when(j == 0)
    def _():
        m_sc[...] = jnp.full_like(m_sc, _NEG)
        l_sc[...] = jnp.zeros_like(l_sc)

    # MXU matmul: compute-dtype inputs, f32 accumulation.  Softmax math stays f32.
    logits = jnp.dot(x_ref[...], w_ref[...], preferred_element_type=jnp.float32)
    logits = logits + b_ref[...].astype(jnp.float32)

    # Mask padded vocab lanes (last vocab tile) and padded rows (last row tile) so
    # garbage from block padding can never corrupt the running max / sum-exp (and
    # everything in scratch stays finite).
    mask = None
    if rem != 0:
        col = j * tile_n + jax.lax.broadcasted_iota(jnp.int32, logits.shape, 1)
        mask = col < vocab
    if (n_rows % tile_m) != 0:
        row = i * tile_m + jax.lax.broadcasted_iota(jnp.int32, logits.shape, 0)
        rmask = row < n_rows
        mask = rmask if mask is None else jnp.logical_and(mask, rmask)
    if mask is not None:
        logits = jnp.where(mask, logits, _NEG)

    # Stash the raw (unnormalized) logits into the row-resident output block.  Its
    # index_map depends only on i, so it stays in VMEM across all vocab tiles and is
    # DMA'd to HBM exactly once per row tile, after the normalization below.
    if rem == 0:
        start = pl.multiple_of(j * tile_n, tile_n)
        o_ref[:, pl.ds(start, tile_n)] = logits.astype(o_ref.dtype)
    else:
        @pl.when(j < last_j)
        def _():
            start = pl.multiple_of(j * tile_n, tile_n)
            o_ref[:, pl.ds(start, tile_n)] = logits.astype(o_ref.dtype)

        @pl.when(j == last_j)
        def _():
            # Last vocab tile is partial: write only the valid columns.
            o_ref[:, pl.ds(last_j * tile_n, rem)] = (
                logits[:, :rem].astype(o_ref.dtype))

    # Streaming (flash-style) log-sum-exp over vocab tiles.
    m_prev = m_sc[...]
    m_new = jnp.maximum(m_prev, jnp.max(logits, axis=-1, keepdims=True))
    l_sc[...] = (l_sc[...] * jnp.exp(m_prev - m_new)
                 + jnp.sum(jnp.exp(logits - m_new), axis=-1, keepdims=True))
    m_sc[...] = m_new

    # Last vocab tile: normalize the whole row-resident block in place (pure VMEM
    # traffic), so only final log-probs are written back to HBM.
    @pl.when(j == last_j)
    def _():
        lse = m_sc[...] + jnp.log(l_sc[...])
        o_ref[...] = (o_ref[...].astype(jnp.float32) - lse).astype(o_ref.dtype)


@functools.partial(
    jax.jit, static_argnames=("tile_m", "tile_n", "compute_dtype", "out_dtype"))
def generator_forward(x, w_t, b, *, tile_m=512, tile_n=512,
                      compute_dtype=jnp.bfloat16, out_dtype=jnp.float32):
    """log_softmax(x @ w_t + b, axis=-1) — the Generator forward pass.

    x:   (B, S, d_model)
    w_t: (d_model, vocab)   (nn.Linear weight, pre-transposed)
    b:   (vocab,)
    """
    B, S, d_model = x.shape
    vocab = w_t.shape[1]
    N = B * S

    in_bytes = jnp.dtype(compute_dtype).itemsize
    out_bytes = jnp.dtype(out_dtype).itemsize

    # ---- vocab tile: multiple of 128 lanes (default 512, MXU-friendly).
    tn = min(tile_n, _round_up(vocab, 128))
    tn = _round_up(tn, 128)
    grid_n = pl.cdiv(vocab, tn)
    rem = vocab % tn                    # valid columns of the last vocab tile (0 = exact)

    # ---- VMEM budget per generation (v5e/v6e: 128 MiB, v7x: 64 MiB), with headroom.
    vmem_cap = _vmem_capacity_bytes()
    budget = int(vmem_cap * 0.85)

    # Double-buffered weight + bias vocab tiles (independent of tile_m).
    fixed_bytes = 2 * (d_model * tn * in_bytes + tn * 4)
    # Per-row cost: double-buffered x tile, double-buffered row-resident full-vocab
    # output block, and the two (tile_m, 1) f32 scratch accumulators.
    per_row_bytes = 2 * (d_model * in_bytes + vocab * out_bytes + 4)

    # ---- row tile: sublane/MXU-aligned, as large as the VMEM budget allows.
    row_align = 16 if in_bytes == 2 else 8      # bf16 native sublane tile is (16, 128)
    tm = _round_up(min(tile_m, _round_up(N, row_align)), row_align)
    max_tm = max((budget - fixed_bytes - (2 << 20)) // per_row_bytes, row_align)
    tm = max(min(tm, (int(max_tm) // row_align) * row_align), row_align)
    grid_m = pl.cdiv(N, tm)

    vmem_limit = int(min(max(fixed_bytes + tm * per_row_bytes + (2 << 20), 32 << 20),
                         vmem_cap))

    x2 = x.reshape(N, d_model).astype(compute_dtype)
    w = w_t.astype(compute_dtype)       # in production keep the weight in bf16 already
    b2 = b.reshape(1, vocab).astype(jnp.float32)

    kernel = functools.partial(
        _generator_kernel, n_rows=N, vocab=vocab, tile_m=tm, tile_n=tn,
        grid_n=grid_n, rem=rem)

    out = pl.pallas_call(
        kernel,
        out_shape=jax.ShapeDtypeStruct((N, vocab), out_dtype),
        grid_spec=pltpu.PrefetchScalarGridSpec(
            num_scalar_prefetch=0,
            grid=(grid_m, grid_n),
            in_specs=[
                pl.BlockSpec((tm, d_model), lambda i, j: (i, 0)),   # x row tile (resident over j)
                pl.BlockSpec((d_model, tn), lambda i, j: (0, j)),   # weight vocab tile
                pl.BlockSpec((1, tn), lambda i, j: (0, j)),         # bias vocab tile
            ],
            out_specs=pl.BlockSpec((tm, vocab), lambda i, j: (i, 0)),  # row-resident full-vocab block
            scratch_shapes=[pltpu.VMEM((tm, 1), jnp.float32),       # running max
                            pltpu.VMEM((tm, 1), jnp.float32)],      # running sum-exp
        ),
        compiler_params=pltpu.CompilerParams(
            dimension_semantics=("parallel", "arbitrary"),
            vmem_limit_bytes=vmem_limit),
        cost_estimate=pl.CostEstimate(
            flops=2 * N * d_model * vocab,
            transcendentals=N * vocab,
            # Weight is re-streamed once per row tile (grid_m); x and output once.
            bytes_accessed=(N * d_model * in_bytes
                            + grid_m * d_model * vocab * in_bytes
                            + vocab * 4
                            + N * vocab * out_bytes)),
    )(x2, w, b2)

    return out.reshape(B, S, vocab)


if __name__ == "__main__":
    # Small shapes consistent with the module; vocab NOT a multiple of 128 so the
    # in-kernel vocab masking, partial last-tile store and streaming LSE are hit.
    batch, seq, d_model, vocab = 2, 8, 32, 320

    key = jax.random.PRNGKey(0)
    kx, kw, kb = jax.random.split(key, 3)

    # nn.Linear(d_model, vocab): weight (vocab, d_model), bias (vocab,)
    bound = 1.0 / (d_model ** 0.5)
    weight = jax.random.uniform(kw, (vocab, d_model), jnp.float32, -bound, bound)
    bias = jax.random.uniform(kb, (vocab,), jnp.float32, -bound, bound)
    x = jax.random.normal(kx, (batch, seq, d_model), jnp.float32)

    def reference(xv, wv, bv):
        # Same math as F.log_softmax(proj(x), -1), with the same bf16 input cast the
        # kernel uses for the MXU matmul (accumulation in f32).
        xc = xv.astype(jnp.bfloat16).astype(jnp.float32)
        wc = wv.astype(jnp.bfloat16).astype(jnp.float32)
        return jax.nn.log_softmax(
            jnp.einsum("bsd,vd->bsv", xc, wc,
                       precision=jax.lax.Precision.HIGHEST) + bv, axis=-1)

    # 1) vocab not a multiple of the vocab tile -> masked lanes + multi-tile LSE.
    out = jax.block_until_ready(
        generator_forward(x, weight.T, bias, tile_m=128, tile_n=128))
    ref = reference(x, weight, bias)
    assert out.shape == (batch, seq, vocab)
    assert jnp.allclose(out, ref, atol=1e-4, rtol=1e-4), \
        float(jnp.max(jnp.abs(out - ref)))

    # 2) vocab an exact tile multiple, default (large) tiles clamped to the problem.
    vocab2 = 256
    w2 = jax.random.uniform(kw, (vocab2, d_model), jnp.float32, -bound, bound)
    b2 = jax.random.uniform(kb, (vocab2,), jnp.float32, -bound, bound)
    out2 = jax.block_until_ready(generator_forward(x, w2.T, b2))
    ref2 = reference(x, w2, b2)
    assert jnp.allclose(out2, ref2, atol=1e-4, rtol=1e-4), \
        float(jnp.max(jnp.abs(out2 - ref2)))

    # 3) rows not a multiple of the row tile -> padded-row masking path.
    x3 = jax.random.normal(kx, (batch, 5, d_model), jnp.float32)
    out3 = jax.block_until_ready(
        generator_forward(x3, weight.T, bias, tile_m=128, tile_n=128))
    ref3 = reference(x3, weight, bias)
    assert jnp.allclose(out3, ref3, atol=1e-4, rtol=1e-4), \
        float(jnp.max(jnp.abs(out3 - ref3)))

    print("KERNEL_OK")
</pallas_src>

<mosaic_0001>
module attributes {stable_mosaic.version = 11 : i64} {
  func.func @_generator_kernel(%arg0: i32, %arg1: i32, %arg2: memref<16x32xbf16, #tpu.memory_space<vmem>>, %arg3: memref<32x128xbf16, #tpu.memory_space<vmem>>, %arg4: memref<1x128xf32, #tpu.memory_space<vmem>>, %arg5: memref<16x320xf32, #tpu.memory_space<vmem>>, %arg6: memref<16x1xf32, #tpu.memory_space<vmem>>, %arg7: memref<16x1xf32, #tpu.memory_space<vmem>>) attributes {dimension_semantics = [#tpu.dimension_semantics<parallel>, #tpu.dimension_semantics<arbitrary>], iteration_bounds = array<i64: 1, 3>, scalar_prefetch = 0 : i64, scratch_operands = 2 : i64, tpu.core_type = #tpu.core_type<tc>, window_params = [{transform_indices = @transform_0, window_bounds = array<i64: 16, 32>}, {transform_indices = @transform_1, window_bounds = array<i64: 32, 128>}, {transform_indices = @transform_2, window_bounds = array<i64: 1, 128>}, {transform_indices = @transform_3, window_bounds = array<i64: 16, 320>}]} {
    %c0_i32 = arith.constant 0 : i32
    %0 = arith.cmpi eq, %arg1, %c0_i32 : i32
    %1 = arith.extui %0 : i1 to i32
    %c0_i32_0 = arith.constant 0 : i32
    %2 = arith.cmpi ne, %1, %c0_i32_0 : i32
    scf.if %2 {
      %cst_22 = arith.constant -1.000000e+30 : f32
      %42 = vector.broadcast %cst_22 : f32 to vector<16x1xf32>
      %c0_23 = arith.constant 0 : index
      %c0_24 = arith.constant 0 : index
      %43 = vector.load %arg6[%c0_23, %c0_24] : memref<16x1xf32, #tpu.memory_space<vmem>>, vector<16x1xf32>
      tpu.vector_store %arg6[%c0_23, %c0_24], %42 {strides = array<i32>} : memref<16x1xf32, #tpu.memory_space<vmem>>, vector<16x1xf32>,
      %cst_25 = arith.constant 0.000000e+00 : f32
      %44 = vector.broadcast %cst_25 : f32 to vector<16x1xf32>
      %c0_26 = arith.constant 0 : index
      %c0_27 = arith.constant 0 : index
      %45 = vector.load %arg7[%c0_26, %c0_27] : memref<16x1xf32, #tpu.memory_space<vmem>>, vector<16x1xf32>
      tpu.vector_store %arg7[%c0_26, %c0_27], %44 {strides = array<i32>} : memref<16x1xf32, #tpu.memory_space<vmem>>, vector<16x1xf32>,
    } else {
    }
    %c0 = arith.constant 0 : index
    %c0_1 = arith.constant 0 : index
    %3 = vector.load %arg2[%c0, %c0_1] : memref<16x32xbf16, #tpu.memory_space<vmem>>, vector<16x32xbf16>
    %c0_2 = arith.constant 0 : index
    %c0_3 = arith.constant 0 : index
    %4 = vector.load %arg3[%c0_2, %c0_3] : memref<32x128xbf16, #tpu.memory_space<vmem>>, vector<32x128xbf16>
    %cst = arith.constant dense<0.000000e+00> : vector<16x128xf32>
    %5 = tpu.matmul %3, %4, %cst {dimension_numbers = #tpu.dot_dimension_numbers<[1], [0], [0], [1], [0, 0, 1, 1], [], []>} : vector<16x32xbf16>, vector<32x128xbf16>, vector<16x128xf32> -> vector<16x128xf32>
    %c0_4 = arith.constant 0 : index
    %c0_5 = arith.constant 0 : index
    %6 = vector.load %arg4[%c0_4, %c0_5] : memref<1x128xf32, #tpu.memory_space<vmem>>, vector<1x128xf32>
    %7 = vector.broadcast %6 : vector<1x128xf32> to vector<16x128xf32>
    %8 = arith.addf %5, %7 : vector<16x128xf32>
    %c128_i32 = arith.constant 128 : i32
    %9 = arith.muli %arg1, %c128_i32 : i32
    %10 = tpu.iota {dimensions = array<i32: 1>} : vector<16x128xi32>
    %11 = vector.broadcast %9 : i32 to vector<16x128xi32>
    %12 = arith.addi %11, %10 : vector<16x128xi32>
    %c320_i32 = arith.constant 320 : i32
    %13 = vector.broadcast %c320_i32 : i32 to vector<16x128xi32>
    %14 = arith.cmpi slt, %12, %13 : vector<16x128xi32>
    %cst_6 = arith.constant -1.000000e+30 : f32
    %15 = vector.broadcast %cst_6 : f32 to vector<16x128xf32>
    %16 = arith.select %14, %8, %15 : vector<16x128xi1>, vector<16x128xf32>
    %c2_i32 = arith.constant 2 : i32
    %17 = arith.cmpi slt, %arg1, %c2_i32 : i32
    %18 = arith.extui %17 : i1 to i32
    %c0_i32_7 = arith.constant 0 : i32
    %19 = arith.cmpi ne, %18, %c0_i32_7 : i32
    scf.if %19 {
      %c128_i32_22 = arith.constant 128 : i32
      %42 = arith.muli %arg1, %c128_i32_22 : i32
      %43 = tpu.assume_multiple %42, 128 : i32
      %c0_23 = arith.constant 0 : index
      %44 = arith.index_cast %43 : i32 to index
      %45 = vector.load %arg5[%c0_23, %44] : memref<16x320xf32, #tpu.memory_space<vmem>>, vector<16x128xf32>
      tpu.vector_store %arg5[%c0_23, %44], %16 {strides = array<i32>} : memref<16x320xf32, #tpu.memory_space<vmem>>, vector<16x128xf32>,
    } else {
    }
    %c2_i32_8 = arith.constant 2 : i32
    %20 = arith.cmpi eq, %arg1, %c2_i32_8 : i32
    %21 = arith.extui %20 : i1 to i32
    %c0_i32_9 = arith.constant 0 : i32
    %22 = arith.cmpi ne, %21, %c0_i32_9 : i32
    scf.if %22 {
      %42 = vector.extract_strided_slice %16 {offsets = [0, 0], sizes = [16, 64], strides = [1, 1]} : vector<16x128xf32> to vector<16x64xf32>
      %c0_22 = arith.constant 0 : index
      %c256 = arith.constant 256 : index
      %43 = vector.load %arg5[%c0_22, %c256] : memref<16x320xf32, #tpu.memory_space<vmem>>, vector<16x64xf32>
      tpu.vector_store %arg5[%c0_22, %c256], %42 {strides = array<i32>} : memref<16x320xf32, #tpu.memory_space<vmem>>, vector<16x64xf32>,
    } else {
    }
    %c0_10 = arith.constant 0 : index
    %c0_11 = arith.constant 0 : index
    %23 = vector.load %arg6[%c0_10, %c0_11] : memref<16x1xf32, #tpu.memory_space<vmem>>, vector<16x1xf32>
    %cst_12 = arith.constant dense<0xFF800000> : vector<16xf32>
    %24 = vector.multi_reduction <maximumf>, %16, %cst_12 [1] : vector<16x128xf32> to vector<16xf32>
    %25 = vector.shape_cast %24 : vector<16xf32> to vector<16x1xf32>
    %26 = arith.maximumf %23, %25 : vector<16x1xf32>
    %c0_13 = arith.constant 0 : index
    %c0_14 = arith.constant 0 : index
    %27 = vector.load %arg7[%c0_13, %c0_14] : memref<16x1xf32, #tpu.memory_space<vmem>>, vector<16x1xf32>
    %28 = arith.subf %23, %26 : vector<16x1xf32>
    %29 = math.exp %28 : vector<16x1xf32>
    %30 = arith.mulf %27, %29 : vector<16x1xf32>
    %31 = vector.broadcast %26 : vector<16x1xf32> to vector<16x128xf32>
    %32 = arith.subf %16, %31 : vector<16x128xf32>
    %33 = math.exp %32 : vector<16x128xf32>
    %cst_15 = arith.constant dense<0.000000e+00> : vector<16xf32>
    %34 = vector.multi_reduction <add>, %33, %cst_15 [1] : vector<16x128xf32> to vector<16xf32>
    %35 = vector.shape_cast %34 : vector<16xf32> to vector<16x1xf32>
    %36 = arith.addf %30, %35 : vector<16x1xf32>
    %c0_16 = arith.constant 0 : index
    %c0_17 = arith.constant 0 : index
    %37 = vector.load %arg7[%c0_16, %c0_17] : memref<16x1xf32, #tpu.memory_space<vmem>>, vector<16x1xf32>
    tpu.vector_store %arg7[%c0_16, %c0_17], %36 {strides = array<i32>} : memref<16x1xf32, #tpu.memory_space<vmem>>, vector<16x1xf32>,
    %c0_18 = arith.constant 0 : index
    %c0_19 = arith.constant 0 : index
    %38 = vector.load %arg6[%c0_18, %c0_19] : memref<16x1xf32, #tpu.memory_space<vmem>>, vector<16x1xf32>
    tpu.vector_store %arg6[%c0_18, %c0_19], %26 {strides = array<i32>} : memref<16x1xf32, #tpu.memory_space<vmem>>, vector<16x1xf32>,
    %c2_i32_20 = arith.constant 2 : i32
    %39 = arith.cmpi eq, %arg1, %c2_i32_20 : i32
    %40 = arith.extui %39 : i1 to i32
    %c0_i32_21 = arith.constant 0 : i32
    %41 = arith.cmpi ne, %40, %c0_i32_21 : i32
    scf.if %41 {
      %c0_22 = arith.constant 0 : index
      %c0_23 = arith.constant 0 : index
      %42 = vector.load %arg6[%c0_22, %c0_23] : memref<16x1xf32, #tpu.memory_space<vmem>>, vector<16x1xf32>
      %c0_24 = arith.constant 0 : index
      %c0_25 = arith.constant 0 : index
      %43 = vector.load %arg7[%c0_24, %c0_25] : memref<16x1xf32, #tpu.memory_space<vmem>>, vector<16x1xf32>
      %44 = math.log %43 : vector<16x1xf32>
      %45 = arith.addf %42, %44 : vector<16x1xf32>
      %c0_26 = arith.constant 0 : index
      %c0_27 = arith.constant 0 : index
      %46 = vector.load %arg5[%c0_26, %c0_27] : memref<16x320xf32, #tpu.memory_space<vmem>>, vector<16x320xf32>
      %47 = vector.broadcast %45 : vector<16x1xf32> to vector<16x320xf32>
      %48 = arith.subf %46, %47 : vector<16x320xf32>
      %c0_28 = arith.constant 0 : index
      %c0_29 = arith.constant 0 : index
      %49 = vector.load %arg5[%c0_28, %c0_29] : memref<16x320xf32, #tpu.memory_space<vmem>>, vector<16x320xf32>
      tpu.vector_store %arg5[%c0_28, %c0_29], %48 {strides = array<i32>} : memref<16x320xf32, #tpu.memory_space<vmem>>, vector<16x320xf32>,
    } else {
    }
    return
  }
  func.func @transform_0(%arg0: i32, %arg1: i32) -> (i32, i32) {
    %c0_i32 = arith.constant 0 : i32
    %c0_i32_0 = arith.constant 0 : i32
    return %arg0, %c0_i32 : i32, i32
  }
  func.func @transform_1(%arg0: i32, %arg1: i32) -> (i32, i32) {
    %c0_i32 = arith.constant 0 : i32
    %c0_i32_0 = arith.constant 0 : i32
    return %c0_i32, %arg1 : i32, i32
  }
  func.func @transform_2(%arg0: i32, %arg1: i32) -> (i32, i32) {
    %c0_i32 = arith.constant 0 : i32
    %c0_i32_0 = arith.constant 0 : i32
    return %c0_i32, %arg1 : i32, i32
  }
  func.func @transform_3(%arg0: i32, %arg1: i32) -> (i32, i32) {
    %c0_i32 = arith.constant 0 : i32
    %c0_i32_0 = arith.constant 0 : i32
    return %arg0, %c0_i32 : i32, i32
  }
}

</mosaic_0001>

<llo_original>
// kernel: generator_forward.1
$region0: #{generator_forward.1}
  #allocation0 [shape = 'u32[]', space=smem, size = 0x4, offset = 0x4, fixed_abs, tag = 'smem constant byte address 0x4 - core index']
  #allocation1 [shape = 'u32[144,128]{1,0:T(1,128)}', space=vmem, size = 0x12000, scoped, tag = 'internal scratch']
  #allocation2 [shape = 'f32[16,1]{1,0:T(8,128)}', space=vmem, size = 0x2000, scoped, tag = 'scratch operand']
  #allocation3 [shape = 'f32[16,1]{1,0:T(8,128)}', space=vmem, size = 0x2000, scoped, tag = 'scratch operand']
  %s0 = inlined_call_operand.vmem [shape: bf16[16,32], index: 0, kind: input, shape index: {}]
  %s1 = inlined_call_operand.vmem [shape: bf16[32,320], index: 1, kind: input, shape index: {}]
  %s2 = inlined_call_operand.vmem [shape: f32[1,320], index: 2, kind: input, shape index: {}]
  %s3 = inlined_call_operand.hbm [shape: f32[16,320], index: 3, kind: output, shape index: {}]
  %s4 = sld [smem:[#allocation0]]
  $region102: #{generator_forward.1} parent=0
    _
  %s6 = ssub.s32 1, %s4
  %s7 = scalar_select 0, %s6, %s4
  $region1: #{generator_forward.1} parent=0
    #allocation4 [shape = 'u8[16384]{0}', space=vmem, size = 0x4000, scoped, tag = 'input window, operand 1']
    #allocation5 [shape = 'u8[24576]{0}', space=vmem, size = 0x6000, scoped, tag = 'output window, operand 0, single buffered']
    #allocation6 [shape = 's32[2]{0}', space=sflag, size = 0x8, scoped, tag = 'scoped memory for generator_forward.1']
    %8 = vsyncpa [#allocation6], 0
    loop: start=0, step=1, limit=5
    $region2: #{generator_forward.1} parent=1 // loop_pre_header
      _
    $region3: #{generator_forward.1} parent=1 // loop_header
      %s10 = sphi 0, %s14
      %p11 = scmp.ge.s32.totalorder %s10, 5
      %s17 = sphi 0, %s29
      %s18 = sphi 0, %s25
      %s19 = sphi 0, %s17
      %s20 = sphi 0, %s18
      %s21 = sphi 0, %s19
      %s22 = sphi 0, %s20
      %s32 = sphi 0, %s34
      %s35 = sphi 0, %s32
      %s36 = sphi 0, %s35
      %s52 = sphi 0, %s36
      %s58 = sphi 0, %s60
      %s61 = sphi 0, %s58
      %s62 = sphi 0, %s61
      %s78 = sphi 0, %s62
      %s84 = sphi 0, %s86
      %s87 = sphi 0, %s84
      %s88 = sphi 0, %s87
      %s104 = sphi 0, %s88
      %s110 = sphi 0, %s112
      %s113 = sphi 0, %s110
      %s114 = sphi 0, %s113
      %s130 = sphi 0, %s114
    $region4: #{generator_forward.1} parent=1 // loop_header_branch
      %13 = sbr.rel (%p11) target = $region8
    $region5: #{generator_forward.1} parent=1 // loop_body
      %s15 = ssub.s32 %s10, 1
      %s16 = ssub.s32 %s10, 2
      %s23 = sadd.s32 1, %s18
      %p24 = scmp.ge.s32.totalorder %s23, 3
      %s25 = scalar_select %p24, 0, %s23
      %s26 = sadd.s32 1, %s17
      %s27 = scalar_select %p24, %s26, %s17
      %p28 = scmp.ge.s32.totalorder %s27, 1
      %s29 = scalar_select %p28, 0, %s27
      %s30 = ssub.s32 %s17, %s29
      %p31 = scmp.eq.s32.totalorder %s30, 0
      %s33 = sadd.s32 %s32, 1
      %s34 = scalar_select %p31, %s32, %s33
      %p37 = pneg %p31
      %p38 = scmp.eq.s32.totalorder %s10, 2
      %p39 = por %p37, %p38
      %p40 = scmp.ne.s32.totalorder %s32, %s35
      %p41 = scmp.eq.s32.totalorder %s10, 0
      %p42 = por %p40, %p41
      %p43 = scmp.ne.s32.totalorder %s32, %s35
      %p44 = scmp.eq.s32.totalorder %s15, 2
      %p45 = por %p43, %p44
      %p46 = scmp.ne.s32.totalorder %s35, %s36
      %p47 = scmp.eq.s32.totalorder %s15, 0
      %p48 = por %p46, %p47
      %p49 = scmp.ne.s32.totalorder %s35, %s36
      %p50 = scmp.eq.s32.totalorder %s16, 2
      %p51 = por %p49, %p50
      %p53 = scmp.ne.s32.totalorder %s36, %s52
      %p54 = scmp.eq.s32.totalorder %s16, 0
      %p55 = por %p53, %p54
      %s56 = ssub.s32 %s18, %s25
      %p57 = scmp.eq.s32.totalorder %s56, 0
      %s59 = sadd.s32 %s58, 1
      %s60 = scalar_select %p57, %s58, %s59
      %p63 = pneg %p57
      %p64 = scmp.eq.s32.totalorder %s10, 2
      %p65 = por %p63, %p64
      %p66 = scmp.ne.s32.totalorder %s58, %s61
      %p67 = scmp.eq.s32.totalorder %s10, 0
      %p68 = por %p66, %p67
      %p69 = scmp.ne.s32.totalorder %s58, %s61
      %p70 = scmp.eq.s32.totalorder %s15, 2
      %p71 = por %p69, %p70
      %p72 = scmp.ne.s32.totalorder %s61, %s62
      %p73 = scmp.eq.s32.totalorder %s15, 0
      %p74 = por %p72, %p73
      %p75 = scmp.ne.s32.totalorder %s61, %s62
      %p76 = scmp.eq.s32.totalorder %s16, 2
      %p77 = por %p75, %p76
      %p79 = scmp.ne.s32.totalorder %s62, %s78
      %p80 = scmp.eq.s32.totalorder %s16, 0
      %p81 = por %p79, %p80
      %s82 = ssub.s32 %s18, %s25
      %p83 = scmp.eq.s32.totalorder %s82, 0
      %s85 = sadd.s32 %s84, 1
      %s86 = scalar_select %p83, %s84, %s85
      %p89 = pneg %p83
      %p90 = scmp.eq.s32.totalorder %s10, 2
      %p91 = por %p89, %p90
      %p92 = scmp.ne.s32.totalorder %s84, %s87
      %p93 = scmp.eq.s32.totalorder %s10, 0
      %p94 = por %p92, %p93
      %p95 = scmp.ne.s32.totalorder %s84, %s87
      %p96 = scmp.eq.s32.totalorder %s15, 2
      %p97 = por %p95, %p96
      %p98 = scmp.ne.s32.totalorder %s87, %s88
      %p99 = scmp.eq.s32.totalorder %s15, 0
      %p100 = por %p98, %p99
      %p101 = scmp.ne.s32.totalorder %s87, %s88
      %p102 = scmp.eq.s32.totalorder %s16, 2
      %p103 = por %p101, %p102
      %p105 = scmp.ne.s32.totalorder %s88, %s104
      %p106 = scmp.eq.s32.totalorder %s16, 0
      %p107 = por %p105, %p106
      %s108 = ssub.s32 %s17, %s29
      %p109 = scmp.eq.s32.totalorder %s108, 0
      %s111 = sadd.s32 %s110, 1
      %s112 = scalar_select %p109, %s110, %s111
      %p115 = pneg %p109
      %p116 = scmp.eq.s32.totalorder %s10, 2
      %p117 = por %p115, %p116
      %p118 = scmp.ne.s32.totalorder %s110, %s113
      %p119 = scmp.eq.s32.totalorder %s10, 0
      %p120 = por %p118, %p119
      %p121 = scmp.ne.s32.totalorder %s110, %s113
      %p122 = scmp.eq.s32.totalorder %s15, 2
      %p123 = por %p121, %p122
      %p124 = scmp.ne.s32.totalorder %s113, %s114
      %p125 = scmp.eq.s32.totalorder %s15, 0
      %p126 = por %p124, %p125
      %p127 = scmp.ne.s32.totalorder %s113, %s114
      %p128 = scmp.eq.s32.totalorder %s16, 2
      %p129 = por %p127, %p128
      %p131 = scmp.ne.s32.totalorder %s114, %s130
      %p132 = scmp.eq.s32.totalorder %s16, 0
      %p133 = por %p131, %p132
      %p134 = scmp.le.s32.totalorder 1, %s10
      %p135 = scmp.lt.s32.totalorder %s10, 4
      %p136 = pnand %p134, %p135
      %p137 = pneg %p136
      // Predicated region
      $region9: #{generator_forward.1} parent=5 // pred_check
        _
      $region10: #{generator_forward.1} parent=5 // pred_check_branch
        %139 = sbr.rel (%p136) target = $region12
      $region11: #{generator_forward.1} parent=5 // pred_region
        %s140 = ssub.s32 %s10, 1
        // Predicated region
        $region13: #{generator_forward.1} parent=11 // pred_check
          %p141 = pneg %p48
        $region14: #{generator_forward.1} parent=11 // pred_check_branch
          %143 = sbr.rel (%p141) target = $region16
        $region15: #{generator_forward.1} parent=11 // pred_region
          %s144 = smul.u32 2, %s19
          %p145 = scmp.lt.s32.totalorder %s144, 1
          %s146 = scalar_select %p145, %s144, 1
          %s147 = smul.addr %s146, 4
          %s148 = scalar_lea.vmem %s0, %s147
          %s149 = smul.u32 2, %s19
        $region16: #{generator_forward.1} parent=11 // pred_fallthru
          _
      $region12: #{generator_forward.1} parent=5 // pred_fallthru
        _
      %p150 = scmp.lt.s32.totalorder %s10, 3
      // Predicated region
      $region17: #{generator_forward.1} parent=5 // pred_check
        %p151 = pneg %p150
      $region18: #{generator_forward.1} parent=5 // pred_check_branch
        %153 = sbr.rel (%p151) target = $region20
      $region19: #{generator_forward.1} parent=5 // pred_region
        // Predicated region
        $region21: #{generator_forward.1} parent=19 // pred_check
          %p154 = pneg %p68
        $region22: #{generator_forward.1} parent=19 // pred_check_branch
          %156 = sbr.rel (%p154) target = $region24
        $region23: #{generator_forward.1} parent=19 // pred_region
          %s157 = sand.u32 %s58, 1
          %s158 = sand.u32 %s58, 1
          %s159 = smul.addr %s158, 16
          %s160 = scalar_lea.vmem [#allocation4], %s159
          %s161 = smul.addr %s18, 4
          %s162 = scalar_lea.vmem %s1, %s161
          // Predicated region
          $region25: #{generator_forward.1} parent=23 // pred_check
            _
          $region26: #{generator_forward.1} parent=23 // pred_check_branch
            %164 = sbr.rel (0) target = $region28
          $region27: #{generator_forward.1} parent=23 // pred_region
            // Predicated region
            $region29: #{generator_forward.1} parent=27 // pred_check
              _
            $region30: #{generator_forward.1} parent=27 // pred_check_branch
              %166 = sbr.rel target = $region32
            $region31: #{generator_forward.1} parent=27 // pred_region
              // Predicated region
              $region44: #{generator_forward.1} parent=31 // pred_check
                _
              $region45: #{generator_forward.1} parent=31 // pred_check_branch
                %187 = sbr.rel (0) target = $region47
              $region46: #{generator_forward.1} parent=31 // pred_region
                loop: start=0, step=1, limit=1
                $region48: #{generator_forward.1} parent=46 // loop_pre_header
                  _
                $region49: #{generator_forward.1} parent=46 // loop_header
                  %s189 = sphi 0, %s193
                  %p190 = scmp.ge.s32.totalorder %s189, 1
                  %s194 = sphi %s162, %s162
                  %s195 = sphi %s160, %s160
                $region50: #{generator_forward.1} parent=46 // loop_header_branch
                  %192 = sbr.rel (%p190) target = $region54
                $region51: #{generator_forward.1} parent=46 // loop_body
                  _
                $region52: #{generator_forward.1} parent=46 // loop_footer
                  %s193 = sadd.s32 1, %s189
                $region53: #{generator_forward.1} parent=46 // loop_footer_branch
                  %188 = sbr.rel target = $region49
                $region54: #{generator_forward.1} parent=46 // loop_exit
                  _
                loop: start=0, step=1, limit=1
                $region55: #{generator_forward.1} parent=46 // loop_pre_header
                  _
                $region56: #{generator_forward.1} parent=46 // loop_header
                  %s198 = sphi 0, %s202
                  %p199 = scmp.ge.s32.totalorder %s198, 1
                  %s203 = sphi %s162, %s162
                  %s204 = sphi %s160, %s160
                $region57: #{generator_forward.1} parent=46 // loop_header_branch
                  %201 = sbr.rel (%p199) target = $region61
                $region58: #{generator_forward.1} parent=46 // loop_body
                  %v205 = vld [vmem:[%s203] sm:$0xf]
                  %206 = vst [vmem:[%s204] sm:$0xf] %v205
                  %v207 = vld [vmem:[%s203 + $0xc] sm:$0xf]
                  %208 = vst [vmem:[%s204 + $0x4] sm:$0xf] %v207
                  %v209 = vld [vmem:[%s203 + $0x18] sm:$0xf]
                  %210 = vst [vmem:[%s204 + $0x8] sm:$0xf] %v209
                  %v211 = vld [vmem:[%s203 + $0x24] sm:$0xf]
                  %212 = vst [vmem:[%s204 + $0xc] sm:$0xf] %v211
                $region59: #{generator_forward.1} parent=46 // loop_footer
                  %s202 = sadd.s32 1, %s198
                $region60: #{generator_forward.1} parent=46 // loop_footer_branch
                  %197 = sbr.rel target = $region56
                $region61: #{generator_forward.1} parent=46 // loop_exit
                  _
              $region47: #{generator_forward.1} parent=31 // pred_fallthru
                _
            $region32: #{generator_forward.1} parent=27 // pred_fallthru
              _
            // Predicated region
            $region33: #{generator_forward.1} parent=27 // pred_check
              _
            $region34: #{generator_forward.1} parent=27 // pred_check_branch
              %168 = sbr.rel (0) target = $region36
            $region35: #{generator_forward.1} parent=27 // pred_region
              loop: start=0, step=1, limit=1
              $region37: #{generator_forward.1} parent=35 // loop_pre_header
                _
              $region38: #{generator_forward.1} parent=35 // loop_header
                %s171 = sphi 0, %s175
                %p172 = scmp.ge.s32.totalorder %s171, 1
                %s176 = sphi %s162, %s162
                %s177 = sphi %s160, %s160
              $region39: #{generator_forward.1} parent=35 // loop_header_branch
                %174 = sbr.rel (%p172) target = $region43
              $region40: #{generator_forward.1} parent=35 // loop_body
                %v178 = vld [vmem:[%s176] sm:$0xf]
                %179 = vst [vmem:[%s177] sm:$0xf] %v178
                %v180 = vld [vmem:[%s176 + $0xc] sm:$0xf]
                %181 = vst [vmem:[%s177 + $0x4] sm:$0xf] %v180
                %v182 = vld [vmem:[%s176 + $0x18] sm:$0xf]
                %183 = vst [vmem:[%s177 + $0x8] sm:$0xf] %v182
                %v184 = vld [vmem:[%s176 + $0x24] sm:$0xf]
                %185 = vst [vmem:[%s177 + $0xc] sm:$0xf] %v184
              $region41: #{generator_forward.1} parent=35 // loop_footer
                %s175 = sadd.s32 1, %s171
              $region42: #{generator_forward.1} parent=35 // loop_footer_branch
                %170 = sbr.rel target = $region38
              $region43: #{generator_forward.1} parent=35 // loop_exit
                _
            $region36: #{generator_forward.1} parent=27 // pred_fallthru
              _
          $region28: #{generator_forward.1} parent=23 // pred_fallthru
            _
          %213 = vnop
        $region24: #{generator_forward.1} parent=19 // pred_fallthru
          _
        // Predicated region
        $region62: #{generator_forward.1} parent=19 // pred_check
          %p214 = pneg %p94
        $region63: #{generator_forward.1} parent=19 // pred_check_branch
          %216 = sbr.rel (%p214) target = $region65
        $region64: #{generator_forward.1} parent=19 // pred_region
          %p217 = scmp.lt.s32.totalorder %s18, 2
          %s218 = scalar_select %p217, %s18, 2
          %s219 = scalar_lea.vmem %s2, %s218
        $region65: #{generator_forward.1} parent=19 // pred_fallthru
          _
      $region20: #{generator_forward.1} parent=5 // pred_fallthru
        _
      %p220 = scmp.le.s32.totalorder 1, %s10
      %p221 = scmp.lt.s32.totalorder %s10, 4
      %p222 = pnand %p220, %p221
      %p223 = pneg %p222
      // Predicated region
      $region66: #{generator_forward.1} parent=5 // pred_check
        _
      $region67: #{generator_forward.1} parent=5 // pred_check_branch
        %225 = sbr.rel (%p222) target = $region69
      $region68: #{generator_forward.1} parent=5 // pred_region
        %s226 = ssub.s32 %s10, 1
        %s227 = sand.u32 %s61, 1
        %s228 = sand.u32 %s61, 1
        %s229 = smul.addr %s228, 16
        %s230 = scalar_lea.vmem [#allocation4], %s229
        // Predicated region
        $region70: #{generator_forward.1} parent=68 // pred_check
          %p231 = pneg %p74
        $region71: #{generator_forward.1} parent=68 // pred_check_branch
          %233 = sbr.rel (%p231) target = $region73
        $region72: #{generator_forward.1} parent=68 // pred_region
          _
        $region73: #{generator_forward.1} parent=68 // pred_fallthru
          _
        %s234 = smul.u32 2, %s19
        %p235 = scmp.lt.s32.totalorder %s234, 1
        %s236 = scalar_select %p235, %s234, 1
        %s237 = smul.addr %s236, 4
        %s238 = scalar_lea.vmem %s0, %s237
        %p239 = pneg %p48
        %p240 = pneg %p45
        %s241 = sand.u32 %s61, 1
        %s242 = sand.u32 %s61, 1
        %s243 = smul.addr %s242, 16
        %s244 = scalar_lea.vmem [#allocation4], %s243
        %p245 = pneg %p74
        %p246 = pneg %p71
        %p247 = scmp.lt.s32.totalorder %s20, 2
        %s248 = scalar_select %p247, %s20, 2
        %s249 = scalar_lea.vmem %s2, %s248
        %p250 = pneg %p100
        %p251 = pneg %p97
        %p252 = pneg %p126
        %p253 = pneg %p123
        %s254 = smul.u32 2, %s19
        %p255 = scmp.lt.s32.totalorder %s254, 1
        %s256 = scalar_select %p255, %s254, 1
        %s257 = smul.addr %s256, 4
        %s258 = scalar_lea.vmem %s0, %s257
        %s259 = smul.u32 2, %s19
        %p260 = scmp.lt.s32.totalorder %s20, 2
        %s261 = scalar_select %p260, %s20, 2
        %s262 = scalar_lea.vmem %s2, %s261
        %s263 = smul.u32 2, %s19
        %p265 = scmp.eq.s32.totalorder %s20, 0
        // Predicated region
        $region74: #{generator_forward.1} parent=68 // pred_check
          %p266 = pneg %p265
        $region75: #{generator_forward.1} parent=68 // pred_check_branch
          %268 = sbr.rel (%p266) target = $region77
        $region76: #{generator_forward.1} parent=68 // pred_region
          %vm269 = vcmask 7168
          %270 = vst.msk [vmem:[#allocation2] sm:$0xff] %vm269, -1e+30
          %271 = vst.msk [vmem:[#allocation2 + $0x8] sm:$0xff] %vm269, -1e+30
          %272 = vst.msk [vmem:[#allocation3] sm:$0xff] %vm269, 0.0
          %273 = vst.msk [vmem:[#allocation3 + $0x8] sm:$0xff] %vm269, 0.0
        $region77: #{generator_forward.1} parent=68 // pred_fallthru
          _
        %v274 = vld [vmem:[%s258] sm:$0xf]
        %v275 = vld [vmem:[%s258 + $0x4] sm:$0xf]
        %v276 = vld [vmem:[%s230] sm:$0xf]
        %v277 = vld [vmem:[%s230 + $0x4] sm:$0xf]
        %v278 = vld [vmem:[%s230 + $0x8] sm:$0xf]
        %v279 = vld [vmem:[%s230 + $0xc] sm:$0xf]
        %v280 = vld [vmem:[%s262] sm:$0x1]
        %v282 = vlaneseq
        %v283 = vshrl.u32 %v282, 7
        %v284 = vsub.s32 0, %v283
        %v285 = vrot.slane %v280, %v284
        %v289 = vunpack.c.l.b16 %v274
        %v290 = vunpack.c.l.b16 %v275
        %v291 = vpack.c.b16 %v290, %v289
        %v296 = vunpack.c.l.b16 %v276
        %v297 = vunpack.c.l.b16 %v277
        %v298 = vunpack.c.l.b16 %v278
        %v299 = vunpack.c.l.b16 %v279
        %v300 = vpack.c.b16 %v297, %v296
        %v301 = vpack.c.b16 %v299, %v298
        %vm304 = vcmask 261120
        %v306 = vsel %vm304, %v291, 0
        %308 = vmatprep.subr.bf16.mxu0 0
        %309 = vmatpush1.bf16.msra.mxu0 %v300
        %310 = vmatprep.subr.bf16.mxu0 0
        %311 = vmatpush1.bf16.msra.mxu0 %v301
        %312 = vmatprep.subr.bf16.mxu0 0
        %313 = vmatpush1.bf16.msra.mxu0 0
        %314 = vmatprep.subr.bf16.mxu0 0
        %315 = vmatpush1.bf16.msra.mxu0 0
        %316 = vmatprep.subr.bf16.mxu0 0
        %317 = vmatpush1.bf16.msra.mxu0 0
        %318 = vmatprep.subr.bf16.mxu0 0
        %319 = vmatpush1.bf16.msra.mxu0 0
        %320 = vmatprep.subr.bf16.mxu0 0
        %321 = vmatpush1.bf16.msra.mxu0 0
        %322 = vmatprep.subr.bf16.mxu0 0
        %323 = vmatpush1.bf16.msra.mxu0 0
        %324 = vmatprep.subr.bf16.mxu0 0
        %325 = vmatpush1.bf16.msra.mxu0 0
        %326 = vmatprep.subr.bf16.mxu0 0
        %327 = vmatpush1.bf16.msra.mxu0 0
        %328 = vmatprep.subr.bf16.mxu0 0
        %329 = vmatpush1.bf16.msra.mxu0 0
        %330 = vmatprep.subr.bf16.mxu0 0
        %331 = vmatpush1.bf16.msra.mxu0 0
        %332 = vmatprep.subr.bf16.mxu0 0
        %333 = vmatpush1.bf16.msra.mxu0 0
        %334 = vmatprep.subr.bf16.mxu0 0
        %335 = vmatpush1.bf16.msra.mxu0 0
        %336 = vmatprep.subr.bf16.mxu0 0
        %337 = vmatpush1.bf16.msra.mxu0 0
        %338 = vmatprep.subr.bf16.mxu0 0
        %339 = vmatpush1.bf16.msra.mxu0 0
        %340 = vmatprep.mubr.bf16.mxu0 0
        %341 = vmatmul.mubr.bf16.gmra.mrb[0].mxu0 %v306
        %v342 = vpop.f32.mrb[0].mxu0
        %v343 = vadd.f32 %v285, %v342
        %v344 = vpop.f32.mrb[0].mxu0
        %v345 = vpop.f32.mrb[0].mxu0
        %v346 = vadd.f32 %v285, %v345
        %v347 = vpop.f32.mrb[0].mxu0
        %348 = vdwg.mxu0
        %s349 = smul.u32 %s20, 128
        %v350 = vlaneseq
        %v351 = vand.u32 %v350, 127
        %v352 = vstv %s349
        %v353 = vadd.s32 %v352, %v351
        %vm354 = vcmp.lt.s32.totalorder %v353, 320
        %v355 = vsel %vm354, %v343, -1e+30
        %v356 = vsel %vm354, %v346, -1e+30
        %p357 = scmp.lt.s32.totalorder %s20, 2
        // Predicated region
        $region78: #{generator_forward.1} parent=68 // pred_check
          %p358 = pneg %p357
        $region79: #{generator_forward.1} parent=68 // pred_check_branch
          %360 = sbr.rel (%p358) target = $region81
        $region80: #{generator_forward.1} parent=68 // pred_region
          %s361 = sshra.s32 %s349, 7
          %s362 = sand.u32 %s349, 127
          %s363 = smul.addr %s361, 8
          %s364 = scalar_lea.vmem [#allocation5], %s363
          %365 = vst [vmem:[%s364] sm:$0xff] %v355
          %366 = vst [vmem:[%s364 + $0x18] sm:$0xff] %v356
        $region81: #{generator_forward.1} parent=68 // pred_fallthru
          _
        %p367 = scmp.eq.s32.totalorder %s20, 2
        // Predicated region
        $region82: #{generator_forward.1} parent=68 // pred_check
          %p368 = pneg %p367
        $region83: #{generator_forward.1} parent=68 // pred_check_branch
          %370 = sbr.rel (%p368) target = $region85
        $region84: #{generator_forward.1} parent=68 // pred_region
          %vm371 = vcmask 523264
          %372 = vst.msk [vmem:[#allocation5 + $0x10] sm:$0xff] %vm371, %v355
          %373 = vst.msk [vmem:[#allocation5 + $0x28] sm:$0xff] %vm371, %v356
        $region85: #{generator_forward.1} parent=68 // pred_fallthru
          _
        %v374 = vld [vmem:[#allocation2] sm:$0xff]
        %v375 = vld [vmem:[#allocation2 + $0x8] sm:$0xff]
        %376 = vmax.xlane.f32.xlu0 %v355
        %v377 = vpop.xlane.xlu0 %376
        %378 = vmax.xlane.f32.xlu0 %v356
        %v379 = vpop.xlane.xlu0 %378
        %v380 = vmax.f32 %v374, %v377
        %v381 = vmax.f32 %v375, %v379
        %v382 = vld [vmem:[#allocation3] sm:$0xff]
        %v383 = vld [vmem:[#allocation3 + $0x8] sm:$0xff]
        %v384 = vsub.f32 %v374, %v380
        %v385 = vsub.f32 %v375, %v381
        %v386 = vmul.f32 %v384, 1.442695
        %v387 = vpow.pop %v386
        %v388 = vmul.f32 %v385, 1.442695
        %v389 = vpow.pop %v388
        %v390 = vmul.f32 %v382, %v387
        %v391 = vmul.f32 %v383, %v389
        %393 = vset.pattern.permute.xlu0 0
        %394 = vperm.xlu0 %393, %v380
        %v395 = vpop.permute.xlu0 %394
        %398 = vset.pattern.permute.xlu0 0
        %399 = vperm.xlu0 %398, %v381
        %v400 = vpop.permute.xlu0 %399
        %v402 = vsub.f32 %v355, %v395
        %v403 = vsub.f32 %v356, %v400
        %v404 = vmul.f32 %v402, 1.442695
        %v405 = vpow.pop %v404
        %v406 = vmul.f32 %v403, 1.442695
        %v407 = vpow.pop %v406
        %408 = vadd.xlane.f32.xlu0 %v405
        %v409 = vpop.xlane.xlu0 %408
        %410 = vadd.xlane.f32.xlu0 %v407
        %v411 = vpop.xlane.xlu0 %410
        %v412 = vadd.f32 %v390, %v409
        %v413 = vadd.f32 %v391, %v411
        %vm414 = vcmask 7168
        %415 = vst.msk [vmem:[#allocation3] sm:$0xff] %vm414, %v412
        %416 = vst.msk [vmem:[#allocation3 + $0x8] sm:$0xff] %vm414, %v413
        %417 = vst.msk [vmem:[#allocation2] sm:$0xff] %vm414, %v380
        %418 = vst.msk [vmem:[#allocation2 + $0x8] sm:$0xff] %vm414, %v381
        // Predicated region
        $region86: #{generator_forward.1} parent=68 // pred_check
          %p419 = pneg %p367
        $region87: #{generator_forward.1} parent=68 // pred_check_branch
          %421 = sbr.rel (%p419) target = $region89
        $region88: #{generator_forward.1} parent=68 // pred_region
          %v422 = vld [vmem:[#allocation2] sm:$0xff]
          %v423 = vld [vmem:[#allocation2 + $0x8] sm:$0xff]
          %v424 = vld [vmem:[#allocation3] sm:$0xff]
          %v425 = vld [vmem:[#allocation3 + $0x8] sm:$0xff]
          %v426 = vlog2.pop %v424
          %v427 = vmul.f32 %v426, 0.6931472
          %v428 = vlog2.pop %v425
          %v429 = vmul.f32 %v428, 0.6931472
          %v430 = vadd.f32 %v422, %v427
          %v431 = vadd.f32 %v423, %v429
          %v432 = vld [vmem:[#allocation5] sm:$0xff]
          %v433 = vld [vmem:[#allocation5 + $0x8] sm:$0xff]
          %v434 = vld [vmem:[#allocation5 + $0x10] sm:$0xff]
          %v435 = vld [vmem:[#allocation5 + $0x18] sm:$0xff]
          %v436 = vld [vmem:[#allocation5 + $0x20] sm:$0xff]
          %v437 = vld [vmem:[#allocation5 + $0x28] sm:$0xff]
          %439 = vset.pattern.permute.xlu0 0
          %440 = vperm.xlu0 %439, %v430
          %v441 = vpop.permute.xlu0 %440
          %444 = vset.pattern.permute.xlu0 0
          %445 = vperm.xlu0 %444, %v431
          %v446 = vpop.permute.xlu0 %445
          %v448 = vsub.f32 %v432, %v441
          %v449 = vsub.f32 %v433, %v441
          %v450 = vsub.f32 %v434, %v441
          %v451 = vsub.f32 %v435, %v446
          %v452 = vsub.f32 %v436, %v446
          %v453 = vsub.f32 %v437, %v446
          %454 = vst [vmem:[#allocation5] sm:$0xff] %v448
          %455 = vst [vmem:[#allocation5 + $0x8] sm:$0xff] %v449
          %vm456 = vcmask 523264
          %457 = vst.msk [vmem:[#allocation5 + $0x10] sm:$0xff] %vm456, %v450
          %458 = vst [vmem:[#allocation5 + $0x18] sm:$0xff] %v451
          %459 = vst [vmem:[#allocation5 + $0x20] sm:$0xff] %v452
          %460 = vst.msk [vmem:[#allocation5 + $0x28] sm:$0xff] %vm456, %v453
        $region89: #{generator_forward.1} parent=68 // pred_fallthru
          _
        // Predicated region
        $region90: #{generator_forward.1} parent=68 // pred_check
          %p461 = pneg %p123
        $region91: #{generator_forward.1} parent=68 // pred_check_branch
          %463 = sbr.rel (%p461) target = $region93
        $region92: #{generator_forward.1} parent=68 // pred_region
          %s464 = smul.u32 2, %s19
          %s466 = ssub.s32 768, 768
          %467 = vsyncadd [#allocation6], %s466
          %s468 = smul.addr %s464, 3
          %s469 = smul.addr %s468, 128
          %s470 = scalar_lea.hbm %s3, %s469
          %s471 = sshll.u32 [#allocation5], 4
          %s472 = int_to_ptr.vmem [resolvable:$true] %s471
          %477 = dma.vmem_to_hbm [thread:$0]  %s472, 768, %s470, [#allocation6], 384, 384, 24
        $region93: #{generator_forward.1} parent=68 // pred_fallthru
          _
        // Predicated region
        $region94: #{generator_forward.1} parent=68 // pred_check
          %p478 = pneg %p123
        $region95: #{generator_forward.1} parent=68 // pred_check_branch
          %480 = sbr.rel (%p478) target = $region97
        $region96: #{generator_forward.1} parent=68 // pred_region
          %481 = dma.done [#allocation6], 768
        $region97: #{generator_forward.1} parent=68 // pred_fallthru
          _
      $region69: #{generator_forward.1} parent=5 // pred_fallthru
        _
      %p482 = scmp.le.s32.totalorder 2, %s10
      // Predicated region
      $region98: #{generator_forward.1} parent=5 // pred_check
        %p483 = pneg %p482
      $region99: #{generator_forward.1} parent=5 // pred_check_branch
        %485 = sbr.rel (%p483) target = $region101
      $region100: #{generator_forward.1} parent=5 // pred_region
        %s486 = ssub.s32 %s10, 2
      $region101: #{generator_forward.1} parent=5 // pred_fallthru
        _
    $region6: #{generator_forward.1} parent=1 // loop_footer
      %s14 = sadd.s32 1, %s10
    $region7: #{generator_forward.1} parent=1 // loop_footer_branch
      %9 = sbr.rel target = $region3
    $region8: #{generator_forward.1} parent=1 // loop_exit
      _
    %487 = vsyncpa [#allocation6], 1
    %s488 = scalar_lea.sflag [#allocation6], 1
    %489 = vsyncpa %s488, 1

</llo_original>
